<compile_context>
chip_gen: v5e
topology: v5e:2x2
jax: 0.10.0
libtpu: 0.0.40
codegen_flags: <defaults>
</compile_context>

<pallas_src>
import jax
import jax.numpy as jnp
from jax.experimental import pallas as pl
from jax.experimental.pallas import tpu as pltpu

EPS = 1e-5


def _round_up(x, m):
    return (x + m - 1) // m * m


# ---------------------------------------------------------------------------
# Kernel
# ---------------------------------------------------------------------------
def acgcnn_conv_kernel(
    node_ref,       # [N, F]   f32   (residual + epilogue)
    node_blk_ref,   # [2N, 2F] bf16  block-diagonal [[node,0],[0,node]]
    wn_f_ref,       # [2F, F]  bf16  vstack(Wdst_f, Wsrc_f), BN-message scaled
    wn_s_ref,       # [2F, F]  bf16  vstack(Wdst_s, Wsrc_s), BN-message scaled
    we_f_ref,       # [Fe, F]  bf16  edge weights, filter half, BN-message scaled
    we_s_ref,       # [Fe, F]  bf16  edge weights, gate half,   BN-message scaled
    bias_f_ref,     # [1, F]   f32   folded bias (linears + BN-message), filter half
    bias_s_ref,     # [1, F]   f32   folded bias, gate half
    scale_ref,      # [1, F]   f32   folded BatchNorm1d(F) scale
    shift_ref,      # [1, F]   f32   folded BatchNorm1d(F) shift
    a_ref,          # [TE, 2N+Fe] bf16  [dst_onehot | src_onehot | edge_feats] edge tile
    out_ref,        # [N, F]   f32
    bf_ref,         # scratch [2N+Fe, F] bf16  (B matrix, filter half)
    bs_ref,         # scratch [2N+Fe, F] bf16  (B matrix, gate half)
    acc_ref,        # scratch [N, F] f32       (scatter accumulator)
):
    k = pl.program_id(0)
    n = acc_ref.shape[0]
    two_n = 2 * n

    @pl.when(k == 0)
    def _init():
        # Node projections for both endpoints and both gate halves (BN-message
        # scale already folded into the weights).  node_blk is block-diagonal,
        # so a single matmul directly yields [dst-projections ; src-projections]
        # stacked on the sublane axis -- no lane slicing.
        pf = jnp.dot(node_blk_ref[...], wn_f_ref[...],
                     preferred_element_type=jnp.float32)
        ps = jnp.dot(node_blk_ref[...], wn_s_ref[...],
                     preferred_element_type=jnp.float32)
        bf_ref[0:two_n, :] = pf.astype(bf_ref.dtype)
        bs_ref[0:two_n, :] = ps.astype(bs_ref.dtype)
        bf_ref[two_n:, :] = we_f_ref[...]
        bs_ref[two_n:, :] = we_s_ref[...]
        acc_ref[...] = jnp.zeros_like(acc_ref)

    a = a_ref[...]                                        # [TE, 2N+Fe] bf16

    # Fused gather (u_add_v) + edge projection + BN-message, per gate half.
    h_f = jnp.dot(a, bf_ref[...], preferred_element_type=jnp.float32) + bias_f_ref[...]
    h_s = jnp.dot(a, bs_ref[...], preferred_element_type=jnp.float32) + bias_s_ref[...]

    # Gated message (f32 epilogue).
    msg = jax.nn.sigmoid(h_f) * jax.nn.softplus(h_s)      # [TE, F] f32

    # update_all(copy_e, sum): scatter-add onto destination nodes.  The dst
    # one-hot is the leading N columns of `a`; contract over the edge axis.
    dst_oh = a[:, 0:n]                                    # [TE, N] bf16
    acc_ref[...] += jax.lax.dot_general(
        dst_oh, msg.astype(a.dtype),
        dimension_numbers=(((0,), (0,)), ((), ())),
        preferred_element_type=jnp.float32)

    @pl.when(k == pl.num_programs(0) - 1)
    def _finalize():
        h = acc_ref[...] * scale_ref[...] + shift_ref[...]   # folded BatchNorm1d(F), eval
        out_ref[...] = jax.nn.softplus(node_ref[...] + h)


# ---------------------------------------------------------------------------
# Parameter folding (one-time, wrapper side)
# ---------------------------------------------------------------------------
def fold_params(params, node_features, dtype=jnp.bfloat16):
    """Fold both eval-mode BatchNorms into the linear weights / biases."""
    F = node_features
    s_m = params["bn_m_gamma"] * jax.lax.rsqrt(params["bn_m_var"] + EPS)   # [1, 2F]
    t_m = params["bn_m_beta"] - params["bn_m_mean"] * s_m
    s_f, s_s = s_m[:, :F], s_m[:, F:]
    t_f, t_s = t_m[:, :F], t_m[:, F:]

    def scaled(w, sl, sc):
        return (w[:, sl] * sc).astype(dtype)

    slf, sls = slice(0, F), slice(F, 2 * F)
    # B-row order must match A's column order: [dst_onehot | src_onehot | edge]
    w_node_f = jnp.concatenate([scaled(params["w_dst"], slf, s_f),
                                scaled(params["w_src"], slf, s_f)], axis=0)   # [2F, F]
    w_node_s = jnp.concatenate([scaled(params["w_dst"], sls, s_s),
                                scaled(params["w_src"], sls, s_s)], axis=0)   # [2F, F]
    w_edge_f = scaled(params["w_edge"], slf, s_f)                             # [Fe, F]
    w_edge_s = scaled(params["w_edge"], sls, s_s)                             # [Fe, F]

    b_sum = params["b_src"] + params["b_dst"] + params["b_edge"]              # [1, 2F]
    bias_f = (b_sum[:, :F] * s_f + t_f).astype(jnp.float32)
    bias_s = (b_sum[:, F:] * s_s + t_s).astype(jnp.float32)

    scale_n = (params["bn_gamma"] * jax.lax.rsqrt(params["bn_var"] + EPS)).astype(jnp.float32)
    shift_n = (params["bn_beta"] - params["bn_mean"] * scale_n).astype(jnp.float32)
    return w_node_f, w_node_s, w_edge_f, w_edge_s, bias_f, bias_s, scale_n, shift_n


# ---------------------------------------------------------------------------
# Wrapper
# ---------------------------------------------------------------------------
def acgcnn_conv(node_feats, edge_feats, src_idx, dst_idx, params, *, edge_tile=512):
    N, F = node_feats.shape
    E, Fe = edge_feats.shape
    assert N % 8 == 0 and Fe % 8 == 0, "pad node count / edge features to sublane multiples"

    (w_node_f, w_node_s, w_edge_f, w_edge_s,
     bias_f, bias_s, scale_n, shift_n) = fold_params(params, F)

    dt = jnp.bfloat16
    node_bf = node_feats.astype(dt)
    zero = jnp.zeros((N, F), dt)
    # Block-diagonal node operand: one matmul -> [dst-projections ; src-projections].
    node_blk = jnp.concatenate(
        [jnp.concatenate([node_bf, zero], axis=1),
         jnp.concatenate([zero, node_bf], axis=1)], axis=0)                    # [2N, 2F]

    dst_oh = jax.nn.one_hot(dst_idx, N, dtype=dt)                              # [E, N]
    src_oh = jax.nn.one_hot(src_idx, N, dtype=dt)                              # [E, N]
    a = jnp.concatenate([dst_oh, src_oh, edge_feats.astype(dt)], axis=1)       # [E, 2N+Fe]

    # Tile the edge axis; pad with zero rows (zero one-hots -> zero scatter weight).
    te = min(edge_tile, _round_up(E, 8))
    e_pad = _round_up(E, te)
    if e_pad != E:
        a = jnp.pad(a, ((0, e_pad - E), (0, 0)))
    ktot = 2 * N + Fe
    grid = (e_pad // te,)

    const = lambda k: (0, 0)
    edge_map = lambda k: (k, 0)

    inputs = (node_feats.astype(jnp.float32), node_blk, w_node_f, w_node_s,
              w_edge_f, w_edge_s, bias_f, bias_s, scale_n, shift_n, a)
    in_specs = [
        pl.BlockSpec((N, F), const),
        pl.BlockSpec((2 * N, 2 * F), const),
        pl.BlockSpec((2 * F, F), const),
        pl.BlockSpec((2 * F, F), const),
        pl.BlockSpec((Fe, F), const),
        pl.BlockSpec((Fe, F), const),
        pl.BlockSpec((1, F), const),
        pl.BlockSpec((1, F), const),
        pl.BlockSpec((1, F), const),
        pl.BlockSpec((1, F), const),
        pl.BlockSpec((te, ktot), edge_map),
    ]

    flops = (2 * e_pad * ktot * F * 2          # two fused message matmuls
             + 2 * e_pad * N * F               # scatter matmul
             + 2 * (2 * N) * (2 * F) * F * 2)  # node projections (once)
    bytes_accessed = sum(int(x.size) * x.dtype.itemsize for x in inputs) + N * F * 4
    cost = pl.CostEstimate(flops=int(flops),
                           transcendentals=int(3 * e_pad * F + 2 * N * F),
                           bytes_accessed=int(bytes_accessed))

    return pl.pallas_call(
        acgcnn_conv_kernel,
        out_shape=jax.ShapeDtypeStruct((N, F), jnp.float32),
        grid_spec=pltpu.PrefetchScalarGridSpec(
            num_scalar_prefetch=0,
            grid=grid,
            in_specs=in_specs,
            out_specs=pl.BlockSpec((N, F), const),
            scratch_shapes=[
                pltpu.VMEM((ktot, F), dt),            # B matrix, filter half
                pltpu.VMEM((ktot, F), dt),            # B matrix, gate half
                pltpu.VMEM((N, F), jnp.float32),      # scatter accumulator
            ]),
        compiler_params=pltpu.CompilerParams(
            dimension_semantics=("arbitrary",),        # edge axis is a reduction
            vmem_limit_bytes=48 * 1024 * 1024),
        cost_estimate=cost,
    )(*inputs)


# ---------------------------------------------------------------------------
# Pure-JAX reference (original, unfolded math) for a sanity check
# ---------------------------------------------------------------------------
def acgcnn_conv_reference(node_feats, edge_feats, src_idx, dst_idx, params):
    h_src = node_feats @ params["w_src"] + params["b_src"]
    h_dst = node_feats @ params["w_dst"] + params["b_dst"]
    h_edge = edge_feats @ params["w_edge"] + params["b_edge"]
    m = h_src[src_idx] + h_dst[dst_idx] + h_edge
    s_m = params["bn_m_gamma"] * jax.lax.rsqrt(params["bn_m_var"] + EPS)
    m = (m - params["bn_m_mean"]) * s_m + params["bn_m_beta"]
    F = node_feats.shape[1]
    msg = jax.nn.sigmoid(m[:, :F]) * jax.nn.softplus(m[:, F:])
    h = jnp.zeros_like(node_feats).at[dst_idx].add(msg)
    s_n = params["bn_gamma"] * jax.lax.rsqrt(params["bn_var"] + EPS)
    h = (h - params["bn_mean"]) * s_n + params["bn_beta"]
    return jax.nn.softplus(node_feats + h)


def make_params(key, node_features, edge_features):
    """Deterministic synthetic parameters matching the module's __init__ shapes."""
    F, Fe = node_features, edge_features
    ks = jax.random.split(key, 10)
    return {
        # nn.Linear(F, 2F) x2, nn.Linear(Fe, 2F); stored [in, out]
        "w_src": jax.random.normal(ks[0], (F, 2 * F), jnp.float32) * (1.0 / jnp.sqrt(F)),
        "b_src": jax.random.normal(ks[1], (1, 2 * F), jnp.float32) * 0.01,
        "w_dst": jax.random.normal(ks[2], (F, 2 * F), jnp.float32) * (1.0 / jnp.sqrt(F)),
        "b_dst": jax.random.normal(ks[3], (1, 2 * F), jnp.float32) * 0.01,
        "w_edge": jax.random.normal(ks[4], (Fe, 2 * F), jnp.float32) * (1.0 / jnp.sqrt(Fe)),
        "b_edge": jax.random.normal(ks[5], (1, 2 * F), jnp.float32) * 0.01,
        # BatchNorm1d(2F) running stats / affine (eval mode)
        "bn_m_gamma": 1.0 + 0.1 * jax.random.normal(ks[6], (1, 2 * F), jnp.float32),
        "bn_m_beta": 0.05 * jax.random.normal(ks[7], (1, 2 * F), jnp.float32),
        "bn_m_mean": 0.1 * jax.random.normal(ks[8], (1, 2 * F), jnp.float32),
        "bn_m_var": jnp.ones((1, 2 * F), jnp.float32) * 0.9,
        # BatchNorm1d(F)
        "bn_gamma": jnp.ones((1, F), jnp.float32),
        "bn_beta": jnp.zeros((1, F), jnp.float32),
        "bn_mean": 0.1 * jax.random.normal(ks[9], (1, F), jnp.float32),
        "bn_var": jnp.ones((1, F), jnp.float32) * 1.1,
    }


if __name__ == "__main__":
    NODE_FEATURES = 64   # module default
    EDGE_FEATURES = 32   # module default
    N_NODES = 8
    N_EDGES = 16

    key = jax.random.PRNGKey(0)
    k_node, k_edge, k_src, k_dst, k_par = jax.random.split(key, 5)

    node_feats = jax.random.normal(k_node, (N_NODES, NODE_FEATURES), jnp.float32)
    edge_feats = jax.random.normal(k_edge, (N_EDGES, EDGE_FEATURES), jnp.float32)
    src_idx = jax.random.randint(k_src, (N_EDGES,), 0, N_NODES)
    dst_idx = jax.random.randint(k_dst, (N_EDGES,), 0, N_NODES)

    params = make_params(k_par, NODE_FEATURES, EDGE_FEATURES)

    out = acgcnn_conv(node_feats, edge_feats, src_idx, dst_idx, params)
    out = jax.block_until_ready(out)

    assert out.shape == (N_NODES, NODE_FEATURES)
    assert bool(jnp.all(jnp.isfinite(out)))

    ref = acgcnn_conv_reference(node_feats, edge_feats, src_idx, dst_idx, params)
    max_err = float(jnp.max(jnp.abs(out - ref)))
    assert max_err < 0.35, f"max abs err vs f32 reference: {max_err}"
    print("KERNEL_OK")
</pallas_src>

<mosaic_0001>
module attributes {stable_mosaic.version = 11 : i64} {
  func.func @acgcnn_conv_kernel(%arg0: i32, %arg1: memref<8x64xf32, #tpu.memory_space<vmem>>, %arg2: memref<16x128xbf16, #tpu.memory_space<vmem>>, %arg3: memref<128x64xbf16, #tpu.memory_space<vmem>>, %arg4: memref<128x64xbf16, #tpu.memory_space<vmem>>, %arg5: memref<32x64xbf16, #tpu.memory_space<vmem>>, %arg6: memref<32x64xbf16, #tpu.memory_space<vmem>>, %arg7: memref<1x64xf32, #tpu.memory_space<vmem>>, %arg8: memref<1x64xf32, #tpu.memory_space<vmem>>, %arg9: memref<1x64xf32, #tpu.memory_space<vmem>>, %arg10: memref<1x64xf32, #tpu.memory_space<vmem>>, %arg11: memref<16x48xbf16, #tpu.memory_space<vmem>>, %arg12: memref<8x64xf32, #tpu.memory_space<vmem>>, %arg13: memref<48x64xbf16, #tpu.memory_space<vmem>>, %arg14: memref<48x64xbf16, #tpu.memory_space<vmem>>, %arg15: memref<8x64xf32, #tpu.memory_space<vmem>>) attributes {dimension_semantics = [#tpu.dimension_semantics<arbitrary>], iteration_bounds = array<i64: 1>, scalar_prefetch = 0 : i64, scratch_operands = 3 : i64, tpu.core_type = #tpu.core_type<tc>, window_params = [{pipeline_mode = #tpu.pipeline_mode<synchronous>, transform_indices = @transform_0, window_bounds = array<i64: 8, 64>}, {pipeline_mode = #tpu.pipeline_mode<synchronous>, transform_indices = @transform_1, window_bounds = array<i64: 16, 128>}, {pipeline_mode = #tpu.pipeline_mode<synchronous>, transform_indices = @transform_2, window_bounds = array<i64: 128, 64>}, {pipeline_mode = #tpu.pipeline_mode<synchronous>, transform_indices = @transform_3, window_bounds = array<i64: 128, 64>}, {pipeline_mode = #tpu.pipeline_mode<synchronous>, transform_indices = @transform_4, window_bounds = array<i64: 32, 64>}, {pipeline_mode = #tpu.pipeline_mode<synchronous>, transform_indices = @transform_5, window_bounds = array<i64: 32, 64>}, {pipeline_mode = #tpu.pipeline_mode<synchronous>, transform_indices = @transform_6, window_bounds = array<i64: 1, 64>}, {pipeline_mode = #tpu.pipeline_mode<synchronous>, transform_indices = @transform_7, window_bounds = array<i64: 1, 64>}, {pipeline_mode = #tpu.pipeline_mode<synchronous>, transform_indices = @transform_8, window_bounds = array<i64: 1, 64>}, {pipeline_mode = #tpu.pipeline_mode<synchronous>, transform_indices = @transform_9, window_bounds = array<i64: 1, 64>}, {transform_indices = @transform_10, window_bounds = array<i64: 16, 48>}, {pipeline_mode = #tpu.pipeline_mode<synchronous>, transform_indices = @transform_11, window_bounds = array<i64: 8, 64>}]} {
    %c0_i32 = arith.constant 0 : i32
    %0 = arith.cmpi eq, %arg0, %c0_i32 : i32
    %1 = arith.extui %0 : i1 to i32
    %c0_i32_0 = arith.constant 0 : i32
    %2 = arith.cmpi ne, %1, %c0_i32_0 : i32
    scf.if %2 {
      %c0_21 = arith.constant 0 : index
      %c0_22 = arith.constant 0 : index
      %43 = vector.load %arg2[%c0_21, %c0_22] : memref<16x128xbf16, #tpu.memory_space<vmem>>, vector<16x128xbf16>
      %c0_23 = arith.constant 0 : index
      %c0_24 = arith.constant 0 : index
      %44 = vector.load %arg3[%c0_23, %c0_24] : memref<128x64xbf16, #tpu.memory_space<vmem>>, vector<128x64xbf16>
      %cst_25 = arith.constant dense<0.000000e+00> : vector<16x64xf32>
      %45 = tpu.matmul %43, %44, %cst_25 {dimension_numbers = #tpu.dot_dimension_numbers<[1], [0], [0], [1], [0, 0, 1, 1], [], []>} : vector<16x128xbf16>, vector<128x64xbf16>, vector<16x64xf32> -> vector<16x64xf32>
      %c0_26 = arith.constant 0 : index
      %c0_27 = arith.constant 0 : index
      %46 = vector.load %arg2[%c0_26, %c0_27] : memref<16x128xbf16, #tpu.memory_space<vmem>>, vector<16x128xbf16>
      %c0_28 = arith.constant 0 : index
      %c0_29 = arith.constant 0 : index
      %47 = vector.load %arg4[%c0_28, %c0_29] : memref<128x64xbf16, #tpu.memory_space<vmem>>, vector<128x64xbf16>
      %cst_30 = arith.constant dense<0.000000e+00> : vector<16x64xf32>
      %48 = tpu.matmul %46, %47, %cst_30 {dimension_numbers = #tpu.dot_dimension_numbers<[1], [0], [0], [1], [0, 0, 1, 1], [], []>} : vector<16x128xbf16>, vector<128x64xbf16>, vector<16x64xf32> -> vector<16x64xf32>
      %49 = arith.truncf %45 : vector<16x64xf32> to vector<16x64xbf16>
      %c0_31 = arith.constant 0 : index
      %c0_32 = arith.constant 0 : index
      %50 = vector.load %arg13[%c0_31, %c0_32] : memref<48x64xbf16, #tpu.memory_space<vmem>>, vector<16x64xbf16>
      tpu.vector_store %arg13[%c0_31, %c0_32], %49 {strides = array<i32>} : memref<48x64xbf16, #tpu.memory_space<vmem>>, vector<16x64xbf16>,
      %51 = arith.truncf %48 : vector<16x64xf32> to vector<16x64xbf16>
      %c0_33 = arith.constant 0 : index
      %c0_34 = arith.constant 0 : index
      %52 = vector.load %arg14[%c0_33, %c0_34] : memref<48x64xbf16, #tpu.memory_space<vmem>>, vector<16x64xbf16>
      tpu.vector_store %arg14[%c0_33, %c0_34], %51 {strides = array<i32>} : memref<48x64xbf16, #tpu.memory_space<vmem>>, vector<16x64xbf16>,
      %c0_35 = arith.constant 0 : index
      %c0_36 = arith.constant 0 : index
      %53 = vector.load %arg5[%c0_35, %c0_36] : memref<32x64xbf16, #tpu.memory_space<vmem>>, vector<32x64xbf16>
      %c16 = arith.constant 16 : index
      %c0_37 = arith.constant 0 : index
      %54 = vector.load %arg13[%c16, %c0_37] : memref<48x64xbf16, #tpu.memory_space<vmem>>, vector<32x64xbf16>
      tpu.vector_store %arg13[%c16, %c0_37], %53 {strides = array<i32>} : memref<48x64xbf16, #tpu.memory_space<vmem>>, vector<32x64xbf16>,
      %c0_38 = arith.constant 0 : index
      %c0_39 = arith.constant 0 : index
      %55 = vector.load %arg6[%c0_38, %c0_39] : memref<32x64xbf16, #tpu.memory_space<vmem>>, vector<32x64xbf16>
      %c16_40 = arith.constant 16 : index
      %c0_41 = arith.constant 0 : index
      %56 = vector.load %arg14[%c16_40, %c0_41] : memref<48x64xbf16, #tpu.memory_space<vmem>>, vector<32x64xbf16>
      tpu.vector_store %arg14[%c16_40, %c0_41], %55 {strides = array<i32>} : memref<48x64xbf16, #tpu.memory_space<vmem>>, vector<32x64xbf16>,
      %cst_42 = arith.constant 0.000000e+00 : f32
      %57 = vector.broadcast %cst_42 : f32 to vector<8x64xf32>
      %c0_43 = arith.constant 0 : index
      %c0_44 = arith.constant 0 : index
      %58 = vector.load %arg15[%c0_43, %c0_44] : memref<8x64xf32, #tpu.memory_space<vmem>>, vector<8x64xf32>
      tpu.vector_store %arg15[%c0_43, %c0_44], %57 {strides = array<i32>} : memref<8x64xf32, #tpu.memory_space<vmem>>, vector<8x64xf32>,
    } else {
    }
    %c0 = arith.constant 0 : index
    %c0_1 = arith.constant 0 : index
    %3 = vector.load %arg11[%c0, %c0_1] : memref<16x48xbf16, #tpu.memory_space<vmem>>, vector<16x48xbf16>
    %c0_2 = arith.constant 0 : index
    %c0_3 = arith.constant 0 : index
    %4 = vector.load %arg13[%c0_2, %c0_3] : memref<48x64xbf16, #tpu.memory_space<vmem>>, vector<48x64xbf16>
    %cst = arith.constant dense<0.000000e+00> : vector<16x64xf32>
    %5 = tpu.matmul %3, %4, %cst {dimension_numbers = #tpu.dot_dimension_numbers<[1], [0], [0], [1], [0, 0, 1, 1], [], []>} : vector<16x48xbf16>, vector<48x64xbf16>, vector<16x64xf32> -> vector<16x64xf32>
    %c0_4 = arith.constant 0 : index
    %c0_5 = arith.constant 0 : index
    %6 = vector.load %arg7[%c0_4, %c0_5] : memref<1x64xf32, #tpu.memory_space<vmem>>, vector<1x64xf32>
    %7 = vector.broadcast %6 : vector<1x64xf32> to vector<16x64xf32>
    %8 = arith.addf %5, %7 : vector<16x64xf32>
    %c0_6 = arith.constant 0 : index
    %c0_7 = arith.constant 0 : index
    %9 = vector.load %arg14[%c0_6, %c0_7] : memref<48x64xbf16, #tpu.memory_space<vmem>>, vector<48x64xbf16>
    %cst_8 = arith.constant dense<0.000000e+00> : vector<16x64xf32>
    %10 = tpu.matmul %3, %9, %cst_8 {dimension_numbers = #tpu.dot_dimension_numbers<[1], [0], [0], [1], [0, 0, 1, 1], [], []>} : vector<16x48xbf16>, vector<48x64xbf16>, vector<16x64xf32> -> vector<16x64xf32>
    %c0_9 = arith.constant 0 : index
    %c0_10 = arith.constant 0 : index
    %11 = vector.load %arg8[%c0_9, %c0_10] : memref<1x64xf32, #tpu.memory_space<vmem>>, vector<1x64xf32>
    %12 = vector.broadcast %11 : vector<1x64xf32> to vector<16x64xf32>
    %13 = arith.addf %10, %12 : vector<16x64xf32>
    %14 = arith.negf %8 : vector<16x64xf32>
    %15 = math.exp %14 : vector<16x64xf32>
    %cst_11 = arith.constant 1.000000e+00 : f32
    %16 = vector.broadcast %cst_11 : f32 to vector<16x64xf32>
    %17 = arith.addf %16, %15 : vector<16x64xf32>
    %18 = arith.divf %16, %17 : vector<16x64xf32>
    %cst_12 = arith.constant 0.000000e+00 : f32
    %19 = vector.broadcast %cst_12 : f32 to vector<16x64xf32>
    %20 = arith.maximumf %13, %19 : vector<16x64xf32>
    %21 = vector.broadcast %cst_12 : f32 to vector<16x64xf32>
    %22 = arith.subf %13, %21 : vector<16x64xf32>
    %23 = arith.cmpf one, %22, %22 : vector<16x64xf32>
    %24 = vector.broadcast %cst_12 : f32 to vector<16x64xf32>
    %25 = arith.addf %13, %24 : vector<16x64xf32>
    %26 = math.absf %22 : vector<16x64xf32>
    %cst_13 = arith.constant 0.000000e+00 : f32
    %27 = vector.broadcast %cst_13 : f32 to vector<16x64xf32>
    %28 = arith.subf %27, %26 : vector<16x64xf32>
    %29 = math.exp %28 : vector<16x64xf32>
    %30 = math.log1p %29 : vector<16x64xf32>
    %31 = arith.addf %20, %30 : vector<16x64xf32>
    %32 = arith.select %23, %25, %31 : vector<16x64xi1>, vector<16x64xf32>
    %33 = arith.mulf %18, %32 : vector<16x64xf32>
    %34 = vector.extract_strided_slice %3 {offsets = [0, 0], sizes = [16, 8], strides = [1, 1]} : vector<16x48xbf16> to vector<16x8xbf16>
    %c0_14 = arith.constant 0 : index
    %c0_15 = arith.constant 0 : index
    %35 = vector.load %arg15[%c0_14, %c0_15] : memref<8x64xf32, #tpu.memory_space<vmem>>, vector<8x64xf32>
    %36 = arith.truncf %33 : vector<16x64xf32> to vector<16x64xbf16>
    %cst_16 = arith.constant dense<0.000000e+00> : vector<8x64xf32>
    %37 = tpu.matmul %34, %36, %cst_16 {dimension_numbers = #tpu.dot_dimension_numbers<[0], [0], [1], [1], [0, 1, 1, 1], [], []>} : vector<16x8xbf16>, vector<16x64xbf16>, vector<8x64xf32> -> vector<8x64xf32>
    %38 = arith.addf %35, %37 : vector<8x64xf32>
    %c0_17 = arith.constant 0 : index
    %c0_18 = arith.constant 0 : index
    %39 = vector.load %arg15[%c0_17, %c0_18] : memref<8x64xf32, #tpu.memory_space<vmem>>, vector<8x64xf32>
    tpu.vector_store %arg15[%c0_17, %c0_18], %38 {strides = array<i32>} : memref<8x64xf32, #tpu.memory_space<vmem>>, vector<8x64xf32>,
    %c0_i32_19 = arith.constant 0 : i32
    %40 = arith.cmpi eq, %arg0, %c0_i32_19 : i32
    %41 = arith.extui %40 : i1 to i32
    %c0_i32_20 = arith.constant 0 : i32
    %42 = arith.cmpi ne, %41, %c0_i32_20 : i32
    scf.if %42 {
      %c0_21 = arith.constant 0 : index
      %c0_22 = arith.constant 0 : index
      %43 = vector.load %arg15[%c0_21, %c0_22] : memref<8x64xf32, #tpu.memory_space<vmem>>, vector<8x64xf32>
      %c0_23 = arith.constant 0 : index
      %c0_24 = arith.constant 0 : index
      %44 = vector.load %arg9[%c0_23, %c0_24] : memref<1x64xf32, #tpu.memory_space<vmem>>, vector<1x64xf32>
      %45 = vector.broadcast %44 : vector<1x64xf32> to vector<8x64xf32>
      %46 = arith.mulf %43, %45 : vector<8x64xf32>
      %c0_25 = arith.constant 0 : index
      %c0_26 = arith.constant 0 : index
      %47 = vector.load %arg10[%c0_25, %c0_26] : memref<1x64xf32, #tpu.memory_space<vmem>>, vector<1x64xf32>
      %48 = vector.broadcast %47 : vector<1x64xf32> to vector<8x64xf32>
      %49 = arith.addf %46, %48 : vector<8x64xf32>
      %c0_27 = arith.constant 0 : index
      %c0_28 = arith.constant 0 : index
      %50 = vector.load %arg1[%c0_27, %c0_28] : memref<8x64xf32, #tpu.memory_space<vmem>>, vector<8x64xf32>
      %51 = arith.addf %50, %49 : vector<8x64xf32>
      %cst_29 = arith.constant 0.000000e+00 : f32
      %52 = vector.broadcast %cst_29 : f32 to vector<8x64xf32>
      %53 = arith.maximumf %51, %52 : vector<8x64xf32>
      %54 = vector.broadcast %cst_29 : f32 to vector<8x64xf32>
      %55 = arith.subf %51, %54 : vector<8x64xf32>
      %56 = arith.cmpf one, %55, %55 : vector<8x64xf32>
      %57 = vector.broadcast %cst_29 : f32 to vector<8x64xf32>
      %58 = arith.addf %51, %57 : vector<8x64xf32>
      %59 = math.absf %55 : vector<8x64xf32>
      %cst_30 = arith.constant 0.000000e+00 : f32
      %60 = vector.broadcast %cst_30 : f32 to vector<8x64xf32>
      %61 = arith.subf %60, %59 : vector<8x64xf32>
      %62 = math.exp %61 : vector<8x64xf32>
      %63 = math.log1p %62 : vector<8x64xf32>
      %64 = arith.addf %53, %63 : vector<8x64xf32>
      %65 = arith.select %56, %58, %64 : vector<8x64xi1>, vector<8x64xf32>
      %c0_31 = arith.constant 0 : index
      %c0_32 = arith.constant 0 : index
      %66 = vector.load %arg12[%c0_31, %c0_32] : memref<8x64xf32, #tpu.memory_space<vmem>>, vector<8x64xf32>
      tpu.vector_store %arg12[%c0_31, %c0_32], %65 {strides = array<i32>} : memref<8x64xf32, #tpu.memory_space<vmem>>, vector<8x64xf32>,
    } else {
    }
    return
  }
  func.func @transform_0(%arg0: i32) -> (i32, i32) {
    %c0_i32 = arith.constant 0 : i32
    %c0_i32_0 = arith.constant 0 : i32
    %c0_i32_1 = arith.constant 0 : i32
    return %c0_i32, %c0_i32_0 : i32, i32
  }
  func.func @transform_1(%arg0: i32) -> (i32, i32) {
    %c0_i32 = arith.constant 0 : i32
    %c0_i32_0 = arith.constant 0 : i32
    %c0_i32_1 = arith.constant 0 : i32
    return %c0_i32, %c0_i32_0 : i32, i32
  }
  func.func @transform_2(%arg0: i32) -> (i32, i32) {
    %c0_i32 = arith.constant 0 : i32
    %c0_i32_0 = arith.constant 0 : i32
    %c0_i32_1 = arith.constant 0 : i32
    return %c0_i32, %c0_i32_0 : i32, i32
  }
  func.func @transform_3(%arg0: i32) -> (i32, i32) {
    %c0_i32 = arith.constant 0 : i32
    %c0_i32_0 = arith.constant 0 : i32
    %c0_i32_1 = arith.constant 0 : i32
    return %c0_i32, %c0_i32_0 : i32, i32
  }
  func.func @transform_4(%arg0: i32) -> (i32, i32) {
    %c0_i32 = arith.constant 0 : i32
    %c0_i32_0 = arith.constant 0 : i32
    %c0_i32_1 = arith.constant 0 : i32
    return %c0_i32, %c0_i32_0 : i32, i32
  }
  func.func @transform_5(%arg0: i32) -> (i32, i32) {
    %c0_i32 = arith.constant 0 : i32
    %c0_i32_0 = arith.constant 0 : i32
    %c0_i32_1 = arith.constant 0 : i32
    return %c0_i32, %c0_i32_0 : i32, i32
  }
  func.func @transform_6(%arg0: i32) -> (i32, i32) {
    %c0_i32 = arith.constant 0 : i32
    %c0_i32_0 = arith.constant 0 : i32
    %c0_i32_1 = arith.constant 0 : i32
    return %c0_i32, %c0_i32_0 : i32, i32
  }
  func.func @transform_7(%arg0: i32) -> (i32, i32) {
    %c0_i32 = arith.constant 0 : i32
    %c0_i32_0 = arith.constant 0 : i32
    %c0_i32_1 = arith.constant 0 : i32
    return %c0_i32, %c0_i32_0 : i32, i32
  }
  func.func @transform_8(%arg0: i32) -> (i32, i32) {
    %c0_i32 = arith.constant 0 : i32
    %c0_i32_0 = arith.constant 0 : i32
    %c0_i32_1 = arith.constant 0 : i32
    return %c0_i32, %c0_i32_0 : i32, i32
  }
  func.func @transform_9(%arg0: i32) -> (i32, i32) {
    %c0_i32 = arith.constant 0 : i32
    %c0_i32_0 = arith.constant 0 : i32
    %c0_i32_1 = arith.constant 0 : i32
    return %c0_i32, %c0_i32_0 : i32, i32
  }
  func.func @transform_10(%arg0: i32) -> (i32, i32) {
    %c0_i32 = arith.constant 0 : i32
    %c0_i32_0 = arith.constant 0 : i32
    return %arg0, %c0_i32 : i32, i32
  }
  func.func @transform_11(%arg0: i32) -> (i32, i32) {
    %c0_i32 = arith.constant 0 : i32
    %c0_i32_0 = arith.constant 0 : i32
    %c0_i32_1 = arith.constant 0 : i32
    return %c0_i32, %c0_i32_0 : i32, i32
  }
}

</mosaic_0001>

<llo_original>
// kernel: tpu_custom_call.1
$region0: #{tpu_custom_call.1}
  #allocation0 [shape = 'u32[]', space=smem, size = 0x4, offset = 0x4, fixed_abs, tag = 'smem constant byte address 0x4 - core index']
  #allocation1 [shape = 'u32[72,128]{1,0:T(1,128)}', space=vmem, size = 0x9000, scoped, tag = 'internal scratch']
  #allocation2 [shape = 'bf16[48,64]{1,0:T(8,128)(2,1)}', space=vmem, size = 0x3000, scoped, tag = 'scratch operand']
  #allocation3 [shape = 'bf16[48,64]{1,0:T(8,128)(2,1)}', space=vmem, size = 0x3000, scoped, tag = 'scratch operand']
  #allocation4 [shape = 'f32[8,64]{1,0:T(8,128)}', space=vmem, size = 0x1000, scoped, tag = 'scratch operand']
  %s0 = inlined_call_operand.vmem [shape: f32[8,64], index: 0, kind: input, shape index: {}]
  %s1 = inlined_call_operand.vmem [shape: bf16[16,128], index: 1, kind: input, shape index: {}]
  %s2 = inlined_call_operand.vmem [shape: bf16[128,64], index: 2, kind: input, shape index: {}]
  %s3 = inlined_call_operand.vmem [shape: bf16[128,64], index: 3, kind: input, shape index: {}]
  %s4 = inlined_call_operand.vmem [shape: bf16[32,64], index: 4, kind: input, shape index: {}]
  %s5 = inlined_call_operand.vmem [shape: bf16[32,64], index: 5, kind: input, shape index: {}]
  %s6 = inlined_call_operand.vmem [shape: f32[1,64], index: 6, kind: input, shape index: {}]
  %s7 = inlined_call_operand.vmem [shape: f32[1,64], index: 7, kind: input, shape index: {}]
  %s8 = inlined_call_operand.vmem [shape: f32[1,64], index: 8, kind: input, shape index: {}]
  %s9 = inlined_call_operand.vmem [shape: f32[1,64], index: 9, kind: input, shape index: {}]
  %s10 = inlined_call_operand.vmem [shape: bf16[16,48], index: 10, kind: input, shape index: {}]
  %s11 = inlined_call_operand.hbm [shape: f32[8,64], index: 11, kind: output, shape index: {}]
  %s12 = sld [smem:[#allocation0]]
  $region62: #{tpu_custom_call.1} parent=0
    _
  %s14 = ssub.s32 1, %s12
  %s15 = scalar_select 0, %s14, %s12
  $region1: #{tpu_custom_call.1} parent=0
    #allocation5 [shape = 'u8[4096]{0}', space=vmem, size = 0x1000, scoped, tag = 'output window, operand 0, single buffered']
    #allocation6 [shape = 's32[1]{0}', space=sflag, size = 0x4, scoped, tag = 'scoped memory for tpu_custom_call.1']
    %16 = vsyncpa [#allocation6], 0
    // Predicated region
    $region2: #{tpu_custom_call.1} parent=1 // pred_check
      _
    $region3: #{tpu_custom_call.1} parent=1 // pred_check_branch
      %18 = sbr.rel (0) target = $region5
    $region4: #{tpu_custom_call.1} parent=1 // pred_region
      _
    $region5: #{tpu_custom_call.1} parent=1 // pred_fallthru
      _
    // Predicated region
    $region6: #{tpu_custom_call.1} parent=1 // pred_check
      _
    $region7: #{tpu_custom_call.1} parent=1 // pred_check_branch
      %20 = sbr.rel (0) target = $region9
    $region8: #{tpu_custom_call.1} parent=1 // pred_region
      _
    $region9: #{tpu_custom_call.1} parent=1 // pred_fallthru
      _
    // Predicated region
    $region10: #{tpu_custom_call.1} parent=1 // pred_check
      _
    $region11: #{tpu_custom_call.1} parent=1 // pred_check_branch
      %22 = sbr.rel (0) target = $region13
    $region12: #{tpu_custom_call.1} parent=1 // pred_region
      _
    $region13: #{tpu_custom_call.1} parent=1 // pred_fallthru
      _
    // Predicated region
    $region14: #{tpu_custom_call.1} parent=1 // pred_check
      _
    $region15: #{tpu_custom_call.1} parent=1 // pred_check_branch
      %24 = sbr.rel (0) target = $region17
    $region16: #{tpu_custom_call.1} parent=1 // pred_region
      _
    $region17: #{tpu_custom_call.1} parent=1 // pred_fallthru
      _
    // Predicated region
    $region18: #{tpu_custom_call.1} parent=1 // pred_check
      _
    $region19: #{tpu_custom_call.1} parent=1 // pred_check_branch
      %26 = sbr.rel (0) target = $region21
    $region20: #{tpu_custom_call.1} parent=1 // pred_region
      _
    $region21: #{tpu_custom_call.1} parent=1 // pred_fallthru
      _
    // Predicated region
    $region22: #{tpu_custom_call.1} parent=1 // pred_check
      _
    $region23: #{tpu_custom_call.1} parent=1 // pred_check_branch
      %28 = sbr.rel (0) target = $region25
    $region24: #{tpu_custom_call.1} parent=1 // pred_region
      _
    $region25: #{tpu_custom_call.1} parent=1 // pred_fallthru
      _
    // Predicated region
    $region26: #{tpu_custom_call.1} parent=1 // pred_check
      _
    $region27: #{tpu_custom_call.1} parent=1 // pred_check_branch
      %30 = sbr.rel (0) target = $region29
    $region28: #{tpu_custom_call.1} parent=1 // pred_region
      _
    $region29: #{tpu_custom_call.1} parent=1 // pred_fallthru
      _
    // Predicated region
    $region30: #{tpu_custom_call.1} parent=1 // pred_check
      _
    $region31: #{tpu_custom_call.1} parent=1 // pred_check_branch
      %32 = sbr.rel (0) target = $region33
    $region32: #{tpu_custom_call.1} parent=1 // pred_region
      _
    $region33: #{tpu_custom_call.1} parent=1 // pred_fallthru
      _
    // Predicated region
    $region34: #{tpu_custom_call.1} parent=1 // pred_check
      _
    $region35: #{tpu_custom_call.1} parent=1 // pred_check_branch
      %34 = sbr.rel (0) target = $region37
    $region36: #{tpu_custom_call.1} parent=1 // pred_region
      _
    $region37: #{tpu_custom_call.1} parent=1 // pred_fallthru
      _
    // Predicated region
    $region38: #{tpu_custom_call.1} parent=1 // pred_check
      _
    $region39: #{tpu_custom_call.1} parent=1 // pred_check_branch
      %36 = sbr.rel (0) target = $region41
    $region40: #{tpu_custom_call.1} parent=1 // pred_region
      _
    $region41: #{tpu_custom_call.1} parent=1 // pred_fallthru
      _
    // Predicated region
    $region42: #{tpu_custom_call.1} parent=1 // pred_check
      _
    $region43: #{tpu_custom_call.1} parent=1 // pred_check_branch
      %38 = sbr.rel (0) target = $region45
    $region44: #{tpu_custom_call.1} parent=1 // pred_region
      _
    $region45: #{tpu_custom_call.1} parent=1 // pred_fallthru
      _
    %p40 = scmp.eq.s32.totalorder 0, 0
    // Predicated region
    $region46: #{tpu_custom_call.1} parent=1 // pred_check
      %p41 = pneg %p40
    $region47: #{tpu_custom_call.1} parent=1 // pred_check_branch
      %43 = sbr.rel (%p41) target = $region49
    $region48: #{tpu_custom_call.1} parent=1 // pred_region
      %v44 = vld [vmem:[%s1] sm:$0xf]
      %v45 = vld [vmem:[%s1 + $0x4] sm:$0xf]
      %v46 = vld [vmem:[%s2] sm:$0xf]
      %v47 = vld [vmem:[%s2 + $0x4] sm:$0xf]
      %v48 = vld [vmem:[%s2 + $0x8] sm:$0xf]
      %v49 = vld [vmem:[%s2 + $0xc] sm:$0xf]
      %v50 = vld [vmem:[%s2 + $0x10] sm:$0xf]
      %v51 = vld [vmem:[%s2 + $0x14] sm:$0xf]
      %v52 = vld [vmem:[%s2 + $0x18] sm:$0xf]
      %v53 = vld [vmem:[%s2 + $0x1c] sm:$0xf]
      %v54 = vld [vmem:[%s2 + $0x20] sm:$0xf]
      %v55 = vld [vmem:[%s2 + $0x24] sm:$0xf]
      %v56 = vld [vmem:[%s2 + $0x28] sm:$0xf]
      %v57 = vld [vmem:[%s2 + $0x2c] sm:$0xf]
      %v58 = vld [vmem:[%s2 + $0x30] sm:$0xf]
      %v59 = vld [vmem:[%s2 + $0x34] sm:$0xf]
      %v60 = vld [vmem:[%s2 + $0x38] sm:$0xf]
      %v61 = vld [vmem:[%s2 + $0x3c] sm:$0xf]
      %v64 = vunpack.c.l.b16 %v44
      %v65 = vunpack.c.l.b16 %v45
      %v66 = vpack.c.b16 %v65, %v64
      %v84 = vunpack.c.l.b16 %v46
      %v85 = vunpack.c.l.b16 %v47
      %v86 = vunpack.c.l.b16 %v48
      %v87 = vunpack.c.l.b16 %v49
      %v88 = vunpack.c.l.b16 %v50
      %v89 = vunpack.c.l.b16 %v51
      %v90 = vunpack.c.l.b16 %v52
      %v91 = vunpack.c.l.b16 %v53
      %v92 = vunpack.c.l.b16 %v54
      %v93 = vunpack.c.l.b16 %v55
      %v94 = vunpack.c.l.b16 %v56
      %v95 = vunpack.c.l.b16 %v57
      %v96 = vunpack.c.l.b16 %v58
      %v97 = vunpack.c.l.b16 %v59
      %v98 = vunpack.c.l.b16 %v60
      %v99 = vunpack.c.l.b16 %v61
      %v100 = vpack.c.b16 %v85, %v84
      %v101 = vpack.c.b16 %v87, %v86
      %v102 = vpack.c.b16 %v89, %v88
      %v103 = vpack.c.b16 %v91, %v90
      %v104 = vpack.c.b16 %v93, %v92
      %v105 = vpack.c.b16 %v95, %v94
      %v106 = vpack.c.b16 %v97, %v96
      %v107 = vpack.c.b16 %v99, %v98
      %116 = vmatpush.bf16.msra.mxu0 %v107
      %117 = vmatpush.bf16.msra.mxu0 %v106
      %118 = vmatpush.bf16.msra.mxu0 %v105
      %119 = vmatpush.bf16.msra.mxu0 %v104
      %120 = vmatpush.bf16.msra.mxu0 %v103
      %121 = vmatpush.bf16.msra.mxu0 %v102
      %122 = vmatpush.bf16.msra.mxu0 %v101
      %123 = vmatpush.bf16.msra.mxu0 %v100
      %124 = vmatmul.bf16.gmra.mxu0 %v66
      %v125 = vpop.f32.mrf.mxu0
      %v126 = vadd.f32 0.0, %v125
      %v127 = vpop.f32.mrf.mxu0
      %v128 = vadd.f32 0.0, %v127
      %129 = vdwg.mxu0
      %v130 = vld [vmem:[%s3] sm:$0xf]
      %v131 = vld [vmem:[%s3 + $0x4] sm:$0xf]
      %v132 = vld [vmem:[%s3 + $0x8] sm:$0xf]
      %v133 = vld [vmem:[%s3 + $0xc] sm:$0xf]
      %v134 = vld [vmem:[%s3 + $0x10] sm:$0xf]
      %v135 = vld [vmem:[%s3 + $0x14] sm:$0xf]
      %v136 = vld [vmem:[%s3 + $0x18] sm:$0xf]
      %v137 = vld [vmem:[%s3 + $0x1c] sm:$0xf]
      %v138 = vld [vmem:[%s3 + $0x20] sm:$0xf]
      %v139 = vld [vmem:[%s3 + $0x24] sm:$0xf]
      %v140 = vld [vmem:[%s3 + $0x28] sm:$0xf]
      %v141 = vld [vmem:[%s3 + $0x2c] sm:$0xf]
      %v142 = vld [vmem:[%s3 + $0x30] sm:$0xf]
      %v143 = vld [vmem:[%s3 + $0x34] sm:$0xf]
      %v144 = vld [vmem:[%s3 + $0x38] sm:$0xf]
      %v145 = vld [vmem:[%s3 + $0x3c] sm:$0xf]
      %v162 = vunpack.c.l.b16 %v130
      %v163 = vunpack.c.l.b16 %v131
      %v164 = vunpack.c.l.b16 %v132
      %v165 = vunpack.c.l.b16 %v133
      %v166 = vunpack.c.l.b16 %v134
      %v167 = vunpack.c.l.b16 %v135
      %v168 = vunpack.c.l.b16 %v136
      %v169 = vunpack.c.l.b16 %v137
      %v170 = vunpack.c.l.b16 %v138
      %v171 = vunpack.c.l.b16 %v139
      %v172 = vunpack.c.l.b16 %v140
      %v173 = vunpack.c.l.b16 %v141
      %v174 = vunpack.c.l.b16 %v142
      %v175 = vunpack.c.l.b16 %v143
      %v176 = vunpack.c.l.b16 %v144
      %v177 = vunpack.c.l.b16 %v145
      %v178 = vpack.c.b16 %v163, %v162
      %v179 = vpack.c.b16 %v165, %v164
      %v180 = vpack.c.b16 %v167, %v166
      %v181 = vpack.c.b16 %v169, %v168
      %v182 = vpack.c.b16 %v171, %v170
      %v183 = vpack.c.b16 %v173, %v172
      %v184 = vpack.c.b16 %v175, %v174
      %v185 = vpack.c.b16 %v177, %v176
      %194 = vmatpush.bf16.msra.mxu0 %v185
      %195 = vmatpush.bf16.msra.mxu0 %v184
      %196 = vmatpush.bf16.msra.mxu0 %v183
      %197 = vmatpush.bf16.msra.mxu0 %v182
      %198 = vmatpush.bf16.msra.mxu0 %v181
      %199 = vmatpush.bf16.msra.mxu0 %v180
      %200 = vmatpush.bf16.msra.mxu0 %v179
      %201 = vmatpush.bf16.msra.mxu0 %v178
      %202 = vmatmul.bf16.gmra.mxu0 %v66
      %v203 = vpop.f32.mrf.mxu0
      %v204 = vadd.f32 0.0, %v203
      %v205 = vpop.f32.mrf.mxu0
      %v206 = vadd.f32 0.0, %v205
      %207 = vdwg.mxu0
      %v208 = vpack.c.bf16 %v126, %v126
      %v209 = vpack.c.bf16 %v128, %v128
      %vm210 = vcmask 519168
      %211 = vst.msk [vmem:[#allocation2] sm:$0xf] %vm210, %v208
      %212 = vst.msk [vmem:[#allocation2 + $0x4] sm:$0xf] %vm210, %v209
      %v213 = vpack.c.bf16 %v204, %v204
      %v214 = vpack.c.bf16 %v206, %v206
      %215 = vst.msk [vmem:[#allocation3] sm:$0xf] %vm210, %v213
      %216 = vst.msk [vmem:[#allocation3 + $0x4] sm:$0xf] %vm210, %v214
      %v217 = vld [vmem:[%s4] sm:$0xf]
      %v218 = vld [vmem:[%s4 + $0x4] sm:$0xf]
      %v219 = vld [vmem:[%s4 + $0x8] sm:$0xf]
      %v220 = vld [vmem:[%s4 + $0xc] sm:$0xf]
      %221 = vst.msk [vmem:[#allocation2 + $0x8] sm:$0xf] %vm210, %v217
      %222 = vst.msk [vmem:[#allocation2 + $0xc] sm:$0xf] %vm210, %v218
      %223 = vst.msk [vmem:[#allocation2 + $0x10] sm:$0xf] %vm210, %v219
      %224 = vst.msk [vmem:[#allocation2 + $0x14] sm:$0xf] %vm210, %v220
      %v225 = vld [vmem:[%s5] sm:$0xf]
      %v226 = vld [vmem:[%s5 + $0x4] sm:$0xf]
      %v227 = vld [vmem:[%s5 + $0x8] sm:$0xf]
      %v228 = vld [vmem:[%s5 + $0xc] sm:$0xf]
      %229 = vst.msk [vmem:[#allocation3 + $0x8] sm:$0xf] %vm210, %v225
      %230 = vst.msk [vmem:[#allocation3 + $0xc] sm:$0xf] %vm210, %v226
      %231 = vst.msk [vmem:[#allocation3 + $0x10] sm:$0xf] %vm210, %v227
      %232 = vst.msk [vmem:[#allocation3 + $0x14] sm:$0xf] %vm210, %v228
      %vm233 = vcmask 523264
      %234 = vst.msk [vmem:[#allocation4] sm:$0xff] %vm233, 0.0
    $region49: #{tpu_custom_call.1} parent=1 // pred_fallthru
      _
    %v235 = vld [vmem:[%s10] sm:$0xf]
    %v236 = vld [vmem:[%s10 + $0x4] sm:$0xf]
    %v237 = vld [vmem:[#allocation2] sm:$0xf]
    %v238 = vld [vmem:[#allocation2 + $0x4] sm:$0xf]
    %v239 = vld [vmem:[#allocation2 + $0x8] sm:$0xf]
    %v240 = vld [vmem:[#allocation2 + $0xc] sm:$0xf]
    %v241 = vld [vmem:[#allocation2 + $0x10] sm:$0xf]
    %v242 = vld [vmem:[#allocation2 + $0x14] sm:$0xf]
    %v243 = vld [vmem:[%s6] sm:$0x1]
    %v245 = vperm.slane %v243, 0
    %v249 = vunpack.c.l.b16 %v235
    %v250 = vunpack.c.l.b16 %v236
    %v251 = vpack.c.b16 %v250, %v249
    %v258 = vunpack.c.l.b16 %v237
    %v259 = vunpack.c.l.b16 %v238
    %v260 = vunpack.c.l.b16 %v239
    %v261 = vunpack.c.l.b16 %v240
    %v262 = vunpack.c.l.b16 %v241
    %v263 = vunpack.c.l.b16 %v242
    %v264 = vpack.c.b16 %v259, %v258
    %v265 = vpack.c.b16 %v261, %v260
    %v266 = vpack.c.b16 %v263, %v262
    %vm270 = vcmask 392192
    %v272 = vsel %vm270, %v251, 0
    %274 = vmatpush.bf16.msra.mxu0 0
    %275 = vmatpush.bf16.msra.mxu0 0
    %276 = vmatpush.bf16.msra.mxu0 0
    %277 = vmatpush.bf16.msra.mxu0 0
    %278 = vmatpush.bf16.msra.mxu0 0
    %279 = vmatpush.bf16.msra.mxu0 %v266
    %280 = vmatpush.bf16.msra.mxu0 %v265
    %281 = vmatpush.bf16.msra.mxu0 %v264
    %282 = vmatmul.bf16.gmra.mxu0 %v272
    %v283 = vpop.f32.mrf.mxu0
    %v284 = vadd.f32 %v245, %v283
    %v285 = vpop.f32.mrf.mxu0
    %v286 = vadd.f32 %v245, %v285
    %287 = vdwg.mxu0
    %v288 = vld [vmem:[#allocation3] sm:$0xf]
    %v289 = vld [vmem:[#allocation3 + $0x4] sm:$0xf]
    %v290 = vld [vmem:[#allocation3 + $0x8] sm:$0xf]
    %v291 = vld [vmem:[#allocation3 + $0xc] sm:$0xf]
    %v292 = vld [vmem:[#allocation3 + $0x10] sm:$0xf]
    %v293 = vld [vmem:[#allocation3 + $0x14] sm:$0xf]
    %v294 = vld [vmem:[%s7] sm:$0x1]
    %v296 = vperm.slane %v294, 0
    %v304 = vunpack.c.l.b16 %v288
    %v305 = vunpack.c.l.b16 %v289
    %v306 = vunpack.c.l.b16 %v290
    %v307 = vunpack.c.l.b16 %v291
    %v308 = vunpack.c.l.b16 %v292
    %v309 = vunpack.c.l.b16 %v293
    %v310 = vpack.c.b16 %v305, %v304
    %v311 = vpack.c.b16 %v307, %v306
    %v312 = vpack.c.b16 %v309, %v308
    %316 = vmatpush.bf16.msra.mxu0 0
    %317 = vmatpush.bf16.msra.mxu0 0
    %318 = vmatpush.bf16.msra.mxu0 0
    %319 = vmatpush.bf16.msra.mxu0 0
    %320 = vmatpush.bf16.msra.mxu0 0
    %321 = vmatpush.bf16.msra.mxu0 %v312
    %322 = vmatpush.bf16.msra.mxu0 %v311
    %323 = vmatpush.bf16.msra.mxu0 %v310
    %324 = vmatmul.bf16.gmra.mxu0 %v272
    %v325 = vpop.f32.mrf.mxu0
    %v326 = vadd.f32 %v296, %v325
    %v327 = vpop.f32.mrf.mxu0
    %v328 = vadd.f32 %v296, %v327
    %329 = vdwg.mxu0
    %v330 = vxor.u32 %v284, 2147483648
    %v331 = vxor.u32 %v286, 2147483648
    %v332 = vmul.f32 %v330, 1.442695
    %v333 = vpow.pop %v332
    %v334 = vmul.f32 %v331, 1.442695
    %v335 = vpow.pop %v334
    %v336 = vadd.f32 %v333, 1.0
    %v337 = vadd.f32 %v335, 1.0
    %v338 = vrcp.pop %v336
    %v339 = vmul.f32 %v336, %v338
    %v340 = vsub.f32 1.0, %v339
    %v341 = vmul.f32 %v338, %v340
    %v342 = vadd.f32 %v338, %v341
    %vm343 = vweird.f32 %v336
    %vm344 = vweird.f32 %v338
    %vm345 = vmor %vm343, %vm344
    %v346 = vsel %vm345, %v338, %v342
    %v347 = vand.u32 2147483647, %v336
    %vm348 = vcmp.eq.f32.partialorder %v347, 8.507059e+37
    %v349 = vand.u32 %v336, 2147483648
    %v350 = vor.u32 1.1754944e-38, %v349
    %v351 = vsel %vm348, %v350, %v346
    %v352 = vmul.f32 1.0, %v351
    %v353 = vrcp.pop %v337
    %v354 = vmul.f32 %v337, %v353
    %v355 = vsub.f32 1.0, %v354
    %v356 = vmul.f32 %v353, %v355
    %v357 = vadd.f32 %v353, %v356
    %vm358 = vweird.f32 %v337
    %vm359 = vweird.f32 %v353
    %vm360 = vmor %vm358, %vm359
    %v361 = vsel %vm360, %v353, %v357
    %v362 = vand.u32 2147483647, %v337
    %vm363 = vcmp.eq.f32.partialorder %v362, 8.507059e+37
    %v364 = vand.u32 %v337, 2147483648
    %v365 = vor.u32 1.1754944e-38, %v364
    %v366 = vsel %vm363, %v365, %v361
    %v367 = vmul.f32 1.0, %v366
    %v368 = vmax.f32 %v326, 0.0
    %v369 = vmax.f32 %v328, 0.0
    %vm370 = vcmp.ne.f32.partialorder %v326, %v326
    %vm371 = vcmp.ne.f32.partialorder %v328, %v328
    %v372 = vadd.f32 %v326, 0.0
    %v373 = vadd.f32 %v328, 0.0
    %v374 = vand.u32 2147483647, %v326
    %v375 = vand.u32 2147483647, %v328
    %v376 = vsub.f32 0.0, %v374
    %v377 = vsub.f32 0.0, %v375
    %v378 = vmul.f32 %v376, 1.442695
    %v379 = vpow.pop %v378
    %v380 = vmul.f32 %v377, 1.442695
    %v381 = vpow.pop %v380
    %v382 = vadd.f32 %v379, 1.0
    %v383 = vlog2.pop %v382
    %v384 = vmul.f32 %v383, 0.6931472
    %v385 = vmul.f32 -0.5, %v379
    %v386 = vadd.f32 %v385, 1.0
    %v387 = vmul.f32 %v386, %v379
    %v388 = vand.u32 2147483647, %v379
    %vm389 = vcmp.lt.f32.partialorder %v388, 0.0004427343
    %v390 = vsel %vm389, %v387, %v384
    %v391 = vadd.f32 %v381, 1.0
    %v392 = vlog2.pop %v391
    %v393 = vmul.f32 %v392, 0.6931472
    %v394 = vmul.f32 -0.5, %v381
    %v395 = vadd.f32 %v394, 1.0
    %v396 = vmul.f32 %v395, %v381
    %v397 = vand.u32 2147483647, %v381
    %vm398 = vcmp.lt.f32.partialorder %v397, 0.0004427343
    %v399 = vsel %vm398, %v396, %v393
    %v400 = vadd.f32 %v368, %v390
    %v401 = vadd.f32 %v369, %v399
    %v402 = vsel %vm370, %v372, %v400
    %v403 = vsel %vm371, %v373, %v401
    %v404 = vmul.f32 %v352, %v402
    %v405 = vmul.f32 %v367, %v403
    %v406 = vld [vmem:[#allocation4] sm:$0xff]
    %v407 = vpack.c.bf16 %v405, %v404
    %409 = vxpose.xlu0.c.b16.start [1/8] %v251, 128
    %410 = vxpose.xlu0.c.b16.cont [2/8] 0, 128
    %411 = vxpose.xlu0.c.b16.cont [3/8] 0, 128
    %412 = vxpose.xlu0.c.b16.cont [4/8] 0, 128
    %413 = vxpose.xlu0.c.b16.cont [5/8] 0, 128
    %414 = vxpose.xlu0.c.b16.cont [6/8] 0, 128
    %415 = vxpose.xlu0.c.b16.cont [7/8] 0, 128
    %416 = vxpose.xlu0.c.b16.end [8/8] 0, 128
    %v417 = vpop.trf.xlu0
    %v418 = vpop.trf.xlu0
    %v419 = vpop.trf.xlu0
    %v420 = vpop.trf.xlu0
    %v421 = vpop.trf.xlu0
    %v422 = vpop.trf.xlu0
    %v423 = vpop.trf.xlu0
    %v424 = vpop.trf.xlu0
    %vm425 = vcmask 130048
    %v427 = vsel %vm425, %v417, 0
    %429 = vmatpush.bf16.msra.mxu0 0
    %430 = vmatpush.bf16.msra.mxu0 0
    %431 = vmatpush.bf16.msra.mxu0 0
    %432 = vmatpush.bf16.msra.mxu0 0
    %433 = vmatpush.bf16.msra.mxu0 0
    %434 = vmatpush.bf16.msra.mxu0 0
    %435 = vmatpush.bf16.msra.mxu0 0
    %436 = vmatpush.bf16.msra.mxu0 %v407
    %437 = vmatmul.bf16.gmra.mxu0 %v427
    %v438 = vpop.f32.mrf.mxu0
    %v439 = vadd.f32 0.0, %v438
    %v440 = vpop.f32.mrf.mxu0
    %441 = vdwg.mxu0
    %v442 = vadd.f32 %v406, %v439
    %vm443 = vcmask 523264
    %444 = vst.msk [vmem:[#allocation4] sm:$0xff] %vm443, %v442
    // Predicated region
    $region50: #{tpu_custom_call.1} parent=1 // pred_check
      %p445 = pneg %p40
    $region51: #{tpu_custom_call.1} parent=1 // pred_check_branch
      %447 = sbr.rel (%p445) target = $region53
    $region52: #{tpu_custom_call.1} parent=1 // pred_region
      %v448 = vld [vmem:[#allocation4] sm:$0xff]
      %v449 = vld [vmem:[%s8] sm:$0x1]
      %v451 = vperm.slane %v449, 0
      %v453 = vmul.f32 %v448, %v451
      %v454 = vld [vmem:[%s9] sm:$0x1]
      %v456 = vperm.slane %v454, 0
      %v458 = vadd.f32 %v453, %v456
      %v459 = vld [vmem:[%s0] sm:$0xff]
      %v460 = vadd.f32 %v459, %v458
      %v461 = vmax.f32 %v460, 0.0
      %vm462 = vcmp.ne.f32.partialorder %v460, %v460
      %v463 = vadd.f32 %v460, 0.0
      %v464 = vand.u32 2147483647, %v460
      %v465 = vsub.f32 0.0, %v464
      %v466 = vmul.f32 %v465, 1.442695
      %v467 = vpow.pop %v466
      %v468 = vadd.f32 %v467, 1.0
      %v469 = vlog2.pop %v468
      %v470 = vmul.f32 %v469, 0.6931472
      %v471 = vmul.f32 -0.5, %v467
      %v472 = vadd.f32 %v471, 1.0
      %v473 = vmul.f32 %v472, %v467
      %v474 = vand.u32 2147483647, %v467
      %vm475 = vcmp.lt.f32.partialorder %v474, 0.0004427343
      %v476 = vsel %vm475, %v473, %v470
      %v477 = vadd.f32 %v461, %v476
      %v478 = vsel %vm462, %v463, %v477
      %479 = vst.msk [vmem:[#allocation5] sm:$0xff] %vm443, %v478
    $region53: #{tpu_custom_call.1} parent=1 // pred_fallthru
      _
    // Predicated region
    $region54: #{tpu_custom_call.1} parent=1 // pred_check
      _
    $region55: #{tpu_custom_call.1} parent=1 // pred_check_branch
      %481 = sbr.rel (0) target = $region57
    $region56: #{tpu_custom_call.1} parent=1 // pred_region
      %483 = vsyncadd [#allocation6], 0
      %s485 = sshll.u32 [#allocation5], 4
      %s486 = int_to_ptr.vmem [resolvable:$true] %s485
      %s487 = sshll.u32 %s11, 4
      %s488 = int_to_ptr.hbm [resolvable:$true] %s487
      %490 = dma.vmem_to_hbm [thread:$0]  %s486, 128, %s488, [#allocation6]
    $region57: #{tpu_custom_call.1} parent=1 // pred_fallthru
      _
    // Predicated region
    $region58: #{tpu_custom_call.1} parent=1 // pred_check
      _
    $region59: #{tpu_custom_call.1} parent=1 // pred_check_branch
      %492 = sbr.rel (0) target = $region61
    $region60: #{tpu_custom_call.1} parent=1 // pred_region
      %494 = dma.done [#allocation6], 128
    $region61: #{tpu_custom_call.1} parent=1 // pred_fallthru
      _
    %495 = vsyncpa [#allocation6], 1

</llo_original>
